<compile_context>
chip_gen: v7x
topology: tpu7x:2x2x1
jax: 0.10.0
libtpu: 0.0.40
codegen_flags: <defaults>
</compile_context>

<pallas_src>
import functools
import math

import jax
import jax.numpy as jnp
from jax import lax
from jax.experimental import pallas as pl
from jax.experimental.pallas import tpu as pltpu

_NEG_BIG = -1e30  # finite "minus infinity": robust against masked/padded rows


def _round_up(x, m):
    return ((x + m - 1) // m) * m


# ---------------------------------------------------------------------------
# Kernel 1: fused Q/K/V projection (bias-free Linear x3), scale folded into Q.
# ---------------------------------------------------------------------------
def _qkv_proj_kernel(x_ref, wq_ref, wk_ref, wv_ref, q_ref, k_ref, v_ref,
                     *, scale, compute_dtype):
    x = x_ref[0].astype(compute_dtype)                       # (tile, d_in_p)
    wq = wq_ref[...].astype(compute_dtype)
    wk = wk_ref[...].astype(compute_dtype)
    wv = wv_ref[...].astype(compute_dtype)
    q = jnp.dot(x, wq, preferred_element_type=jnp.float32) * scale
    k = jnp.dot(x, wk, preferred_element_type=jnp.float32)
    v = jnp.dot(x, wv, preferred_element_type=jnp.float32)
    q_ref[0] = q.astype(q_ref.dtype)
    k_ref[0] = k.astype(k_ref.dtype)
    v_ref[0] = v.astype(v_ref.dtype)


# ---------------------------------------------------------------------------
# Kernel 2: flash-style causal attention with online softmax.
# ---------------------------------------------------------------------------
def _flash_attn_kernel(q_ref, k_ref, v_ref, o_ref, m_sc, l_sc, acc_sc,
                       *, tq, tk, s_valid, compute_dtype):
    qi = pl.program_id(1)
    ki = pl.program_id(2)
    nk = pl.num_programs(2)

    @pl.when(ki == 0)
    def _init():
        m_sc[...] = jnp.full_like(m_sc, _NEG_BIG)
        l_sc[...] = jnp.zeros_like(l_sc)
        acc_sc[...] = jnp.zeros_like(acc_sc)

    # Block-level causal skip: process only if some key index <= some query index.
    block_needed = ki * tk < (qi + 1) * tq
    # Per-element masking is only required on diagonal blocks or blocks that
    # contain padded key positions.
    needs_mask = ((ki + 1) * tk - 1 > qi * tq) | ((ki + 1) * tk > s_valid)

    def _update(apply_mask):
        q = q_ref[0]                                         # (tq, d) bf16/f32
        k = k_ref[0]                                         # (tk, d)
        v = v_ref[0]                                         # (tk, d)
        # Q @ K^T without materializing a K transpose (contract last dims).
        s = lax.dot_general(q, k, (((1,), (1,)), ((), ())),
                            preferred_element_type=jnp.float32)   # (tq, tk)
        if apply_mask:
            row = lax.broadcasted_iota(jnp.int32, (tq, tk), 0) + qi * tq
            col = lax.broadcasted_iota(jnp.int32, (tq, tk), 1) + ki * tk
            s = jnp.where((col > row) | (col >= s_valid), _NEG_BIG, s)
        m_prev = m_sc[...]                                   # (tq, 1)
        m_new = jnp.maximum(m_prev, jnp.max(s, axis=-1, keepdims=True))
        alpha = jnp.exp(m_prev - m_new)
        p = jnp.exp(s - m_new)                               # (tq, tk) f32
        l_sc[...] = alpha * l_sc[...] + jnp.sum(p, axis=-1, keepdims=True)
        acc_sc[...] = alpha * acc_sc[...] + jnp.dot(
            p.astype(compute_dtype), v, preferred_element_type=jnp.float32)
        m_sc[...] = m_new

    @pl.when(block_needed & needs_mask)
    def _masked():
        _update(True)

    @pl.when(block_needed & jnp.logical_not(needs_mask))
    def _unmasked():
        _update(False)

    # Finalize as soon as the last causally-needed KV block is processed; the
    # resident output block is written back when the q-block index changes.
    last_needed = jnp.minimum(nk - 1, ((qi + 1) * tq - 1) // tk)

    @pl.when(ki == last_needed)
    def _finalize():
        inv_l = pl.reciprocal(l_sc[...], approx=True)        # EUP slot, ~free
        o_ref[0] = (acc_sc[...] * inv_l).astype(o_ref.dtype)


# ---------------------------------------------------------------------------
# Public wrapper
# ---------------------------------------------------------------------------
def causal_attention(x, wq, wk, wv, *, compute_dtype=jnp.bfloat16):
    """Single-head causal attention (eval mode, qkv_bias=False).

    x: (B, S, d_in); wq/wk/wv: (d_in, d_out) (pre-transposed vs torch Linear,
    i.e. q = x @ wq).  Returns (B, S, d_out) in x.dtype.  Dropout on attention
    weights is an eval-mode no-op.
    """
    B, S, d_in = x.shape
    d_out = wq.shape[1]
    scale = 1.0 / math.sqrt(d_out)

    # Lane-dense padding (feature dims -> multiple of 128) and sequence tiling.
    d_in_p = _round_up(d_in, 128)
    d_out_p = _round_up(d_out, 128)
    tile = 128 if S >= 128 else _round_up(S, 8)
    S_p = _round_up(S, tile)
    nq = S_p // tile

    x_p = jnp.pad(x, ((0, 0), (0, S_p - S), (0, d_in_p - d_in)))
    wq_p = jnp.pad(wq, ((0, d_in_p - d_in), (0, d_out_p - d_out)))
    wk_p = jnp.pad(wk, ((0, d_in_p - d_in), (0, d_out_p - d_out)))
    wv_p = jnp.pad(wv, ((0, d_in_p - d_in), (0, d_out_p - d_out)))

    # ---- pass 1: fused QKV projection ------------------------------------
    proj = pl.pallas_call(
        functools.partial(_qkv_proj_kernel, scale=scale,
                          compute_dtype=compute_dtype),
        out_shape=(jax.ShapeDtypeStruct((B, S_p, d_out_p), compute_dtype),
                   jax.ShapeDtypeStruct((B, S_p, d_out_p), compute_dtype),
                   jax.ShapeDtypeStruct((B, S_p, d_out_p), compute_dtype)),
        grid_spec=pltpu.PrefetchScalarGridSpec(
            num_scalar_prefetch=0,
            grid=(B, nq),
            in_specs=[
                pl.BlockSpec((1, tile, d_in_p), lambda b, i: (b, i, 0)),
                pl.BlockSpec((d_in_p, d_out_p), lambda b, i: (0, 0)),
                pl.BlockSpec((d_in_p, d_out_p), lambda b, i: (0, 0)),
                pl.BlockSpec((d_in_p, d_out_p), lambda b, i: (0, 0)),
            ],
            out_specs=[
                pl.BlockSpec((1, tile, d_out_p), lambda b, i: (b, i, 0)),
                pl.BlockSpec((1, tile, d_out_p), lambda b, i: (b, i, 0)),
                pl.BlockSpec((1, tile, d_out_p), lambda b, i: (b, i, 0)),
            ]),
        compiler_params=pltpu.CompilerParams(
            dimension_semantics=("parallel", "parallel"),
            vmem_limit_bytes=32 * 1024 * 1024),
    )
    q, k, v = proj(x_p, wq_p, wk_p, wv_p)

    # ---- pass 2: flash attention ------------------------------------------
    tq = tk = tile
    nk = S_p // tk

    def q_map(b, qi, ki):
        return (b, qi, 0)

    def kv_map(b, qi, ki):
        # Clamp to the last causally-needed block so skipped (fully-masked)
        # KV blocks never trigger a fresh DMA.
        last = jnp.minimum(nk - 1, ((qi + 1) * tq - 1) // tk)
        return (b, jnp.minimum(ki, last), 0)

    flash = pl.pallas_call(
        functools.partial(_flash_attn_kernel, tq=tq, tk=tk, s_valid=S,
                          compute_dtype=compute_dtype),
        out_shape=jax.ShapeDtypeStruct((B, S_p, d_out_p), x.dtype),
        grid_spec=pltpu.PrefetchScalarGridSpec(
            num_scalar_prefetch=0,
            grid=(B, nq, nk),
            in_specs=[
                pl.BlockSpec((1, tq, d_out_p), q_map),
                pl.BlockSpec((1, tk, d_out_p), kv_map),
                pl.BlockSpec((1, tk, d_out_p), kv_map),
            ],
            out_specs=pl.BlockSpec((1, tq, d_out_p), q_map),
            scratch_shapes=[
                pltpu.VMEM((tq, 1), jnp.float32),        # running max  m
                pltpu.VMEM((tq, 1), jnp.float32),        # running sum  l
                pltpu.VMEM((tq, d_out_p), jnp.float32),  # output accumulator
            ]),
        compiler_params=pltpu.CompilerParams(
            dimension_semantics=("parallel", "parallel", "arbitrary"),
            vmem_limit_bytes=32 * 1024 * 1024),
    )
    out_p = flash(q, k, v)
    return out_p[:, :S, :d_out]


def reference_causal_attention(x, wq, wk, wv):
    """Pure-JAX reference mirroring the PyTorch forward (eval mode)."""
    q = x @ wq
    k = x @ wk
    v = x @ wv
    scores = jnp.einsum("bqd,bkd->bqk", q, k)
    s = x.shape[1]
    mask = jnp.triu(jnp.ones((s, s), dtype=bool), k=1)
    scores = jnp.where(mask[None], -jnp.inf, scores)
    w = jax.nn.softmax(scores / jnp.sqrt(jnp.asarray(k.shape[-1], x.dtype)),
                       axis=-1)
    return jnp.einsum("bqk,bkd->bqd", w, v)


if __name__ == "__main__":
    # Small shapes consistent with the module's forward:
    #   batch=2, seq=8, d_in=16, d_out=32, context_length=8, dropout=0.0
    B, S, D_IN, D_OUT = 2, 8, 16, 32

    key = jax.random.PRNGKey(0)
    kx, kq, kk, kv = jax.random.split(key, 4)
    x = jax.random.normal(kx, (B, S, D_IN), dtype=jnp.float32)
    wq = jax.random.normal(kq, (D_IN, D_OUT), dtype=jnp.float32) / math.sqrt(D_IN)
    wk = jax.random.normal(kk, (D_IN, D_OUT), dtype=jnp.float32) / math.sqrt(D_IN)
    wv = jax.random.normal(kv, (D_IN, D_OUT), dtype=jnp.float32) / math.sqrt(D_IN)

    ref = reference_causal_attention(x, wq, wk, wv)

    # Exact-math path (f32 MXU inputs): tight check against the reference
    # (tolerance covers the approximate EUP reciprocal + flash reassociation).
    out_f32 = jax.block_until_ready(
        causal_attention(x, wq, wk, wv, compute_dtype=jnp.float32))
    assert out_f32.shape == (B, S, D_OUT)
    assert jnp.allclose(out_f32, ref, atol=1e-2, rtol=1e-2), "f32 path mismatch"

    # Default fast path (bf16 MXU inputs, f32 accumulation): looser check.
    out_bf16 = jax.block_until_ready(causal_attention(x, wq, wk, wv))
    assert out_bf16.shape == (B, S, D_OUT)
    assert jnp.allclose(out_bf16, ref, atol=1e-1, rtol=1e-1), "bf16 path mismatch"

    print("KERNEL_OK")
</pallas_src>

<mosaic_0001>
module attributes {stable_mosaic.version = 11 : i64} {
  func.func @_qkv_proj_kernel(%arg0: i32, %arg1: i32, %arg2: memref<1x8x128xf32, #tpu.memory_space<vmem>>, %arg3: memref<128x128xf32, #tpu.memory_space<vmem>>, %arg4: memref<128x128xf32, #tpu.memory_space<vmem>>, %arg5: memref<128x128xf32, #tpu.memory_space<vmem>>, %arg6: memref<1x8x128xf32, #tpu.memory_space<vmem>>, %arg7: memref<1x8x128xf32, #tpu.memory_space<vmem>>, %arg8: memref<1x8x128xf32, #tpu.memory_space<vmem>>) attributes {dimension_semantics = [#tpu.dimension_semantics<parallel>, #tpu.dimension_semantics<parallel>], iteration_bounds = array<i64: 2, 1>, scalar_prefetch = 0 : i64, scratch_operands = 0 : i64, tpu.core_type = #tpu.core_type<tc>, window_params = [{transform_indices = @transform_0, window_bounds = array<i64: 1, 8, 128>}, {pipeline_mode = #tpu.pipeline_mode<synchronous>, transform_indices = @transform_1, window_bounds = array<i64: 128, 128>}, {pipeline_mode = #tpu.pipeline_mode<synchronous>, transform_indices = @transform_2, window_bounds = array<i64: 128, 128>}, {pipeline_mode = #tpu.pipeline_mode<synchronous>, transform_indices = @transform_3, window_bounds = array<i64: 128, 128>}, {transform_indices = @transform_4, window_bounds = array<i64: 1, 8, 128>}, {transform_indices = @transform_5, window_bounds = array<i64: 1, 8, 128>}, {transform_indices = @transform_6, window_bounds = array<i64: 1, 8, 128>}]} {
    %c0 = arith.constant 0 : index
    %c0_0 = arith.constant 0 : index
    %c0_1 = arith.constant 0 : index
    %0 = vector.load %arg2[%c0, %c0_0, %c0_1] : memref<1x8x128xf32, #tpu.memory_space<vmem>>, vector<1x8x128xf32>
    %1 = vector.shape_cast %0 : vector<1x8x128xf32> to vector<8x128xf32>
    %c0_2 = arith.constant 0 : index
    %c0_3 = arith.constant 0 : index
    %2 = vector.load %arg3[%c0_2, %c0_3] : memref<128x128xf32, #tpu.memory_space<vmem>>, vector<128x128xf32>
    %c0_4 = arith.constant 0 : index
    %c0_5 = arith.constant 0 : index
    %3 = vector.load %arg4[%c0_4, %c0_5] : memref<128x128xf32, #tpu.memory_space<vmem>>, vector<128x128xf32>
    %c0_6 = arith.constant 0 : index
    %c0_7 = arith.constant 0 : index
    %4 = vector.load %arg5[%c0_6, %c0_7] : memref<128x128xf32, #tpu.memory_space<vmem>>, vector<128x128xf32>
    %cst = arith.constant dense<0.000000e+00> : vector<8x128xf32>
    %5 = tpu.matmul %1, %2, %cst {dimension_numbers = #tpu.dot_dimension_numbers<[1], [0], [0], [1], [0, 0, 1, 1], [], []>} : vector<8x128xf32>, vector<128x128xf32>, vector<8x128xf32> -> vector<8x128xf32>
    %cst_8 = arith.constant 0.176776692 : f32
    %6 = vector.broadcast %cst_8 : f32 to vector<8x128xf32>
    %7 = arith.mulf %5, %6 : vector<8x128xf32>
    %cst_9 = arith.constant dense<0.000000e+00> : vector<8x128xf32>
    %8 = tpu.matmul %1, %3, %cst_9 {dimension_numbers = #tpu.dot_dimension_numbers<[1], [0], [0], [1], [0, 0, 1, 1], [], []>} : vector<8x128xf32>, vector<128x128xf32>, vector<8x128xf32> -> vector<8x128xf32>
    %cst_10 = arith.constant dense<0.000000e+00> : vector<8x128xf32>
    %9 = tpu.matmul %1, %4, %cst_10 {dimension_numbers = #tpu.dot_dimension_numbers<[1], [0], [0], [1], [0, 0, 1, 1], [], []>} : vector<8x128xf32>, vector<128x128xf32>, vector<8x128xf32> -> vector<8x128xf32>
    %c0_11 = arith.constant 0 : index
    %c0_12 = arith.constant 0 : index
    %c0_13 = arith.constant 0 : index
    %10 = vector.load %arg6[%c0_11, %c0_12, %c0_13] : memref<1x8x128xf32, #tpu.memory_space<vmem>>, vector<1x8x128xf32>
    %11 = vector.shape_cast %10 : vector<1x8x128xf32> to vector<8x128xf32>
    %12 = vector.shape_cast %7 : vector<8x128xf32> to vector<1x8x128xf32>
    tpu.vector_store %arg6[%c0_11, %c0_12, %c0_13], %12 {strides = array<i32>} : memref<1x8x128xf32, #tpu.memory_space<vmem>>, vector<1x8x128xf32>,
    %c0_14 = arith.constant 0 : index
    %c0_15 = arith.constant 0 : index
    %c0_16 = arith.constant 0 : index
    %13 = vector.load %arg7[%c0_14, %c0_15, %c0_16] : memref<1x8x128xf32, #tpu.memory_space<vmem>>, vector<1x8x128xf32>
    %14 = vector.shape_cast %13 : vector<1x8x128xf32> to vector<8x128xf32>
    %15 = vector.shape_cast %8 : vector<8x128xf32> to vector<1x8x128xf32>
    tpu.vector_store %arg7[%c0_14, %c0_15, %c0_16], %15 {strides = array<i32>} : memref<1x8x128xf32, #tpu.memory_space<vmem>>, vector<1x8x128xf32>,
    %c0_17 = arith.constant 0 : index
    %c0_18 = arith.constant 0 : index
    %c0_19 = arith.constant 0 : index
    %16 = vector.load %arg8[%c0_17, %c0_18, %c0_19] : memref<1x8x128xf32, #tpu.memory_space<vmem>>, vector<1x8x128xf32>
    %17 = vector.shape_cast %16 : vector<1x8x128xf32> to vector<8x128xf32>
    %18 = vector.shape_cast %9 : vector<8x128xf32> to vector<1x8x128xf32>
    tpu.vector_store %arg8[%c0_17, %c0_18, %c0_19], %18 {strides = array<i32>} : memref<1x8x128xf32, #tpu.memory_space<vmem>>, vector<1x8x128xf32>,
    return
  }
  func.func @transform_0(%arg0: i32, %arg1: i32) -> (i32, i32, i32) {
    %c0_i32 = arith.constant 0 : i32
    %c0_i32_0 = arith.constant 0 : i32
    return %arg0, %arg1, %c0_i32 : i32, i32, i32
  }
  func.func @transform_1(%arg0: i32, %arg1: i32) -> (i32, i32) {
    %c0_i32 = arith.constant 0 : i32
    %c0_i32_0 = arith.constant 0 : i32
    %c0_i32_1 = arith.constant 0 : i32
    return %c0_i32, %c0_i32_0 : i32, i32
  }
  func.func @transform_2(%arg0: i32, %arg1: i32) -> (i32, i32) {
    %c0_i32 = arith.constant 0 : i32
    %c0_i32_0 = arith.constant 0 : i32
    %c0_i32_1 = arith.constant 0 : i32
    return %c0_i32, %c0_i32_0 : i32, i32
  }
  func.func @transform_3(%arg0: i32, %arg1: i32) -> (i32, i32) {
    %c0_i32 = arith.constant 0 : i32
    %c0_i32_0 = arith.constant 0 : i32
    %c0_i32_1 = arith.constant 0 : i32
    return %c0_i32, %c0_i32_0 : i32, i32
  }
  func.func @transform_4(%arg0: i32, %arg1: i32) -> (i32, i32, i32) {
    %c0_i32 = arith.constant 0 : i32
    %c0_i32_0 = arith.constant 0 : i32
    return %arg0, %arg1, %c0_i32 : i32, i32, i32
  }
  func.func @transform_5(%arg0: i32, %arg1: i32) -> (i32, i32, i32) {
    %c0_i32 = arith.constant 0 : i32
    %c0_i32_0 = arith.constant 0 : i32
    return %arg0, %arg1, %c0_i32 : i32, i32, i32
  }
  func.func @transform_6(%arg0: i32, %arg1: i32) -> (i32, i32, i32) {
    %c0_i32 = arith.constant 0 : i32
    %c0_i32_0 = arith.constant 0 : i32
    return %arg0, %arg1, %c0_i32 : i32, i32, i32
  }
}

</mosaic_0001>

<llo_original>
// kernel: tpu_custom_call.1
$region0: #{tpu_custom_call.1}
  #allocation0 [shape = 'u32[]', space=smem, size = 0x4, offset = 0x4, fixed_abs, tag = 'smem constant byte address 0x4 - core index']
  #allocation1 [shape = 'u32[144,128]{1,0:T(1,128)}', space=vmem, size = 0x12000, scoped, tag = 'internal scratch']
  %s0 = inlined_call_operand.hbm [shape: f32[2,8,128], index: 0, kind: input, shape index: {}]
  %s1 = inlined_call_operand.hbm [shape: f32[128,128], index: 1, kind: input, shape index: {}]
  %s2 = inlined_call_operand.hbm [shape: f32[128,128], index: 2, kind: input, shape index: {}]
  %s3 = inlined_call_operand.hbm [shape: f32[128,128], index: 3, kind: input, shape index: {}]
  %s4 = inlined_call_operand.hbm [shape: f32[2,8,128], index: 4, kind: output, shape index: {0}]
  %s5 = inlined_call_operand.hbm [shape: f32[2,8,128], index: 5, kind: output, shape index: {1}]
  %s6 = inlined_call_operand.hbm [shape: f32[2,8,128], index: 6, kind: output, shape index: {2}]
  %7 = xla_tuple %s4, %s5, %s6
  %s8 = sld [smem:[#allocation0]]
  $region81: #{tpu_custom_call.1} parent=0
    _
  %s10 = ssub.s32 1, %s8
  %s11 = scalar_select 0, %s10, %s8
  $region1: #{tpu_custom_call.1} parent=0
    #allocation2 [shape = 'u8[8192]{0}', space=vmem, size = 0x2000, scoped, tag = 'input window, operand 0']
    #allocation3 [shape = 's32[2]{0}', space=sflag, size = 0x8, scoped, tag = 'scoped memory for tpu_custom_call.1']
    #allocation4 [shape = 's32[2]{0}', space=sflag, size = 0x8, scoped, tag = 'scoped memory for tpu_custom_call.1']
    #allocation5 [shape = 'u8[65536]{0}', space=vmem, size = 0x10000, scoped, tag = 'input window, operand 1, single buffered']
    #allocation6 [shape = 's32[1]{0}', space=sflag, size = 0x4, scoped, tag = 'scoped memory for tpu_custom_call.1']
    #allocation7 [shape = 'u8[65536]{0}', space=vmem, size = 0x10000, scoped, tag = 'input window, operand 2, single buffered']
    #allocation8 [shape = 'u8[65536]{0}', space=vmem, size = 0x10000, scoped, tag = 'input window, operand 3, single buffered']
    #allocation9 [shape = 's32[1]{0}', space=sflag, size = 0x4, scoped, tag = 'scoped memory for tpu_custom_call.1']
    #allocation10 [shape = 'u8[8192]{0}', space=vmem, size = 0x2000, scoped, tag = 'output window, operand 0']
    #allocation11 [shape = 'u8[8192]{0}', space=vmem, size = 0x2000, scoped, tag = 'output window, operand 1']
    #allocation12 [shape = 's32[2]{0}', space=sflag, size = 0x8, scoped, tag = 'scoped memory for tpu_custom_call.1']
    #allocation13 [shape = 'u8[8192]{0}', space=vmem, size = 0x2000, scoped, tag = 'output window, operand 2']
    %12 = vsyncpa [#allocation3], 0
    %s13 = scalar_lea.sflag [#allocation3], 1
    %14 = vsyncpa %s13, 0
    %15 = vsyncpa [#allocation6], 0
    %16 = vsyncpa [#allocation9], 0
    %17 = vsyncpa [#allocation4], 0
    %s18 = scalar_lea.sflag [#allocation4], 1
    %19 = vsyncpa %s18, 0
    %20 = vsyncpa [#allocation12], 0
    %s21 = scalar_lea.sflag [#allocation12], 1
    %22 = vsyncpa %s21, 0
    loop: start=0, step=1, limit=4
    $region2: #{tpu_custom_call.1} parent=1 // loop_pre_header
      _
    $region3: #{tpu_custom_call.1} parent=1 // loop_header
      %s24 = sphi 0, %s28
      %p25 = scmp.ge.s32.totalorder %s24, 4
      %s31 = sphi 0, %s43
      %s32 = sphi 0, %s39
      %s33 = sphi 0, %s31
      %s34 = sphi 0, %s32
      %s35 = sphi 0, %s33
      %s36 = sphi 0, %s34
      %s48 = sphi 0, %s50
      %s51 = sphi 0, %s48
      %s52 = sphi 0, %s51
      %s68 = sphi 0, %s52
      %s72 = sphi 0, %s72
      %s74 = sphi 0, %s72
      %s75 = sphi 0, %s74
      %s89 = sphi 0, %s75
      %s93 = sphi 0, %s93
      %s95 = sphi 0, %s93
      %s96 = sphi 0, %s95
      %s110 = sphi 0, %s96
      %s114 = sphi 0, %s114
      %s116 = sphi 0, %s114
      %s117 = sphi 0, %s116
      %s131 = sphi 0, %s117
      %s139 = sphi 0, %s141
      %s142 = sphi 0, %s139
      %s143 = sphi 0, %s142
      %s159 = sphi 0, %s143
      %s167 = sphi 0, %s169
      %s170 = sphi 0, %s167
      %s171 = sphi 0, %s170
      %s187 = sphi 0, %s171
      %s195 = sphi 0, %s197
      %s198 = sphi 0, %s195
      %s199 = sphi 0, %s198
      %s215 = sphi 0, %s199
    $region4: #{tpu_custom_call.1} parent=1 // loop_header_branch
      %27 = sbr.rel (%p25) target = $region8
    $region5: #{tpu_custom_call.1} parent=1 // loop_body
      %s29 = ssub.s32 %s24, 1
      %s30 = ssub.s32 %s24, 2
      %s37 = sadd.s32 1, %s32
      %p38 = scmp.ge.s32.totalorder %s37, 1
      %s39 = scalar_select %p38, 0, %s37
      %s40 = sadd.s32 1, %s31
      %s41 = scalar_select %p38, %s40, %s31
      %p42 = scmp.ge.s32.totalorder %s41, 2
      %s43 = scalar_select %p42, 0, %s41
      %s44 = ssub.s32 %s31, %s43
      %s45 = ssub.s32 %s32, %s39
      %s46 = sor.u32 %s44, %s45
      %p47 = scmp.eq.s32.totalorder %s46, 0
      %s49 = sadd.s32 %s48, 1
      %s50 = scalar_select %p47, %s48, %s49
      %p53 = pneg %p47
      %p54 = scmp.eq.s32.totalorder %s24, 1
      %p55 = por %p53, %p54
      %p56 = scmp.ne.s32.totalorder %s48, %s51
      %p57 = scmp.eq.s32.totalorder %s24, 0
      %p58 = por %p56, %p57
      %p59 = scmp.ne.s32.totalorder %s48, %s51
      %p60 = scmp.eq.s32.totalorder %s29, 1
      %p61 = por %p59, %p60
      %p62 = scmp.ne.s32.totalorder %s51, %s52
      %p63 = scmp.eq.s32.totalorder %s29, 0
      %p64 = por %p62, %p63
      %p65 = scmp.ne.s32.totalorder %s51, %s52
      %p66 = scmp.eq.s32.totalorder %s30, 1
      %p67 = por %p65, %p66
      %p69 = scmp.ne.s32.totalorder %s52, %s68
      %p70 = scmp.eq.s32.totalorder %s30, 0
      %p71 = por %p69, %p70
      %s73 = sadd.s32 %s72, 1
      %p76 = scmp.eq.s32.totalorder %s24, 1
      %p77 = scmp.ne.s32.totalorder %s72, %s74
      %p78 = scmp.eq.s32.totalorder %s24, 0
      %p79 = por %p77, %p78
      %p80 = scmp.ne.s32.totalorder %s72, %s74
      %p81 = scmp.eq.s32.totalorder %s29, 1
      %p82 = por %p80, %p81
      %p83 = scmp.ne.s32.totalorder %s74, %s75
      %p84 = scmp.eq.s32.totalorder %s29, 0
      %p85 = por %p83, %p84
      %p86 = scmp.ne.s32.totalorder %s74, %s75
      %p87 = scmp.eq.s32.totalorder %s30, 1
      %p88 = por %p86, %p87
      %p90 = scmp.ne.s32.totalorder %s75, %s89
      %p91 = scmp.eq.s32.totalorder %s30, 0
      %p92 = por %p90, %p91
      %s94 = sadd.s32 %s93, 1
      %p97 = scmp.eq.s32.totalorder %s24, 1
      %p98 = scmp.ne.s32.totalorder %s93, %s95
      %p99 = scmp.eq.s32.totalorder %s24, 0
      %p100 = por %p98, %p99
      %p101 = scmp.ne.s32.totalorder %s93, %s95
      %p102 = scmp.eq.s32.totalorder %s29, 1
      %p103 = por %p101, %p102
      %p104 = scmp.ne.s32.totalorder %s95, %s96
      %p105 = scmp.eq.s32.totalorder %s29, 0
      %p106 = por %p104, %p105
      %p107 = scmp.ne.s32.totalorder %s95, %s96
      %p108 = scmp.eq.s32.totalorder %s30, 1
      %p109 = por %p107, %p108
      %p111 = scmp.ne.s32.totalorder %s96, %s110
      %p112 = scmp.eq.s32.totalorder %s30, 0
      %p113 = por %p111, %p112
      %s115 = sadd.s32 %s114, 1
      %p118 = scmp.eq.s32.totalorder %s24, 1
      %p119 = scmp.ne.s32.totalorder %s114, %s116
      %p120 = scmp.eq.s32.totalorder %s24, 0
      %p121 = por %p119, %p120
      %p122 = scmp.ne.s32.totalorder %s114, %s116
      %p123 = scmp.eq.s32.totalorder %s29, 1
      %p124 = por %p122, %p123
      %p125 = scmp.ne.s32.totalorder %s116, %s117
      %p126 = scmp.eq.s32.totalorder %s29, 0
      %p127 = por %p125, %p126
      %p128 = scmp.ne.s32.totalorder %s116, %s117
      %p129 = scmp.eq.s32.totalorder %s30, 1
      %p130 = por %p128, %p129
      %p132 = scmp.ne.s32.totalorder %s117, %s131
      %p133 = scmp.eq.s32.totalorder %s30, 0
      %p134 = por %p132, %p133
      %s135 = ssub.s32 %s31, %s43
      %s136 = ssub.s32 %s32, %s39
      %s137 = sor.u32 %s135, %s136
      %p138 = scmp.eq.s32.totalorder %s137, 0
      %s140 = sadd.s32 %s139, 1
      %s141 = scalar_select %p138, %s139, %s140
      %p144 = pneg %p138
      %p145 = scmp.eq.s32.totalorder %s24, 1
      %p146 = por %p144, %p145
      %p147 = scmp.ne.s32.totalorder %s139, %s142
      %p148 = scmp.eq.s32.totalorder %s24, 0
      %p149 = por %p147, %p148
      %p150 = scmp.ne.s32.totalorder %s139, %s142
      %p151 = scmp.eq.s32.totalorder %s29, 1
      %p152 = por %p150, %p151
      %p153 = scmp.ne.s32.totalorder %s142, %s143
      %p154 = scmp.eq.s32.totalorder %s29, 0
      %p155 = por %p153, %p154
      %p156 = scmp.ne.s32.totalorder %s142, %s143
      %p157 = scmp.eq.s32.totalorder %s30, 1
      %p158 = por %p156, %p157
      %p160 = scmp.ne.s32.totalorder %s143, %s159
      %p161 = scmp.eq.s32.totalorder %s30, 0
      %p162 = por %p160, %p161
      %s163 = ssub.s32 %s31, %s43
      %s164 = ssub.s32 %s32, %s39
      %s165 = sor.u32 %s163, %s164
      %p166 = scmp.eq.s32.totalorder %s165, 0
      %s168 = sadd.s32 %s167, 1
      %s169 = scalar_select %p166, %s167, %s168
      %p172 = pneg %p166
      %p173 = scmp.eq.s32.totalorder %s24, 1
      %p174 = por %p172, %p173
      %p175 = scmp.ne.s32.totalorder %s167, %s170
      %p176 = scmp.eq.s32.totalorder %s24, 0
      %p177 = por %p175, %p176
      %p178 = scmp.ne.s32.totalorder %s167, %s170
      %p179 = scmp.eq.s32.totalorder %s29, 1
      %p180 = por %p178, %p179
      %p181 = scmp.ne.s32.totalorder %s170, %s171
      %p182 = scmp.eq.s32.totalorder %s29, 0
      %p183 = por %p181, %p182
      %p184 = scmp.ne.s32.totalorder %s170, %s171
      %p185 = scmp.eq.s32.totalorder %s30, 1
      %p186 = por %p184, %p185
      %p188 = scmp.ne.s32.totalorder %s171, %s187
      %p189 = scmp.eq.s32.totalorder %s30, 0
      %p190 = por %p188, %p189
      %s191 = ssub.s32 %s31, %s43
      %s192 = ssub.s32 %s32, %s39
      %s193 = sor.u32 %s191, %s192
      %p194 = scmp.eq.s32.totalorder %s193, 0
      %s196 = sadd.s32 %s195, 1
      %s197 = scalar_select %p194, %s195, %s196
      %p200 = pneg %p194
      %p201 = scmp.eq.s32.totalorder %s24, 1
      %p202 = por %p200, %p201
      %p203 = scmp.ne.s32.totalorder %s195, %s198
      %p204 = scmp.eq.s32.totalorder %s24, 0
      %p205 = por %p203, %p204
      %p206 = scmp.ne.s32.totalorder %s195, %s198
      %p207 = scmp.eq.s32.totalorder %s29, 1
      %p208 = por %p206, %p207
      %p209 = scmp.ne.s32.totalorder %s198, %s199
      %p210 = scmp.eq.s32.totalorder %s29, 0
      %p211 = por %p209, %p210
      %p212 = scmp.ne.s32.totalorder %s198, %s199
      %p213 = scmp.eq.s32.totalorder %s30, 1
      %p214 = por %p212, %p213
      %p216 = scmp.ne.s32.totalorder %s199, %s215
      %p217 = scmp.eq.s32.totalorder %s30, 0
      %p218 = por %p216, %p217
      %p219 = scmp.le.s32.totalorder 1, %s24
      %p220 = scmp.lt.s32.totalorder %s24, 3
      %p221 = pnand %p219, %p220
      %p222 = pneg %p221
      // Predicated region
      $region9: #{tpu_custom_call.1} parent=5 // pred_check
        _
      $region10: #{tpu_custom_call.1} parent=5 // pred_check_branch
        %224 = sbr.rel (%p221) target = $region12
      $region11: #{tpu_custom_call.1} parent=5 // pred_region
        %s225 = ssub.s32 %s24, 1
        // Predicated region
        $region13: #{tpu_custom_call.1} parent=11 // pred_check
          %p226 = pneg %p85
        $region14: #{tpu_custom_call.1} parent=11 // pred_check_branch
          %228 = sbr.rel (%p226) target = $region16
        $region15: #{tpu_custom_call.1} parent=11 // pred_region
          %s230 = ssub.s32 2048, 2048
          %231 = vsyncadd [#allocation6], %s230
          %s232 = sshll.u32 [#allocation5], 4
          %s233 = int_to_ptr.vmem [resolvable:$true] %s232
          %238 = dma.hbm_to_vmem [thread:$0]  %s1, 2048, %s233, [#allocation6], 128, 128, 8
        $region16: #{tpu_custom_call.1} parent=11 // pred_fallthru
          _
        // Predicated region
        $region17: #{tpu_custom_call.1} parent=11 // pred_check
          %p239 = pneg %p106
        $region18: #{tpu_custom_call.1} parent=11 // pred_check_branch
          %241 = sbr.rel (%p239) target = $region20
        $region19: #{tpu_custom_call.1} parent=11 // pred_region
          %s243 = ssub.s32 2048, 2048
          %244 = vsyncadd [#allocation6], %s243
          %s245 = sshll.u32 [#allocation7], 4
          %s246 = int_to_ptr.vmem [resolvable:$true] %s245
          %251 = dma.hbm_to_vmem [thread:$0]  %s2, 2048, %s246, [#allocation6], 128, 128, 8
        $region20: #{tpu_custom_call.1} parent=11 // pred_fallthru
          _
        // Predicated region
        $region21: #{tpu_custom_call.1} parent=11 // pred_check
          %p252 = pneg %p127
        $region22: #{tpu_custom_call.1} parent=11 // pred_check_branch
          %254 = sbr.rel (%p252) target = $region24
        $region23: #{tpu_custom_call.1} parent=11 // pred_region
          %s256 = ssub.s32 2048, 2048
          %257 = vsyncadd [#allocation9], %s256
          %s258 = sshll.u32 [#allocation8], 4
          %s259 = int_to_ptr.vmem [resolvable:$true] %s258
          %264 = dma.hbm_to_vmem [thread:$0]  %s3, 2048, %s259, [#allocation9], 128, 128, 8
        $region24: #{tpu_custom_call.1} parent=11 // pred_fallthru
          _
      $region12: #{tpu_custom_call.1} parent=5 // pred_fallthru
        _
      %p265 = scmp.lt.s32.totalorder %s24, 2
      // Predicated region
      $region25: #{tpu_custom_call.1} parent=5 // pred_check
        %p266 = pneg %p265
      $region26: #{tpu_custom_call.1} parent=5 // pred_check_branch
        %268 = sbr.rel (%p266) target = $region28
      $region27: #{tpu_custom_call.1} parent=5 // pred_region
        // Predicated region
        $region29: #{tpu_custom_call.1} parent=27 // pred_check
          %p269 = pneg %p58
        $region30: #{tpu_custom_call.1} parent=27 // pred_check_branch
          %271 = sbr.rel (%p269) target = $region32
        $region31: #{tpu_custom_call.1} parent=27 // pred_region
          %s272 = sand.u32 %s48, 1
          %s273 = scalar_lea.sflag [#allocation3], %s272
          %s274 = sand.u32 %s48, 1
          %s275 = smul.addr %s274, 8
          %s276 = scalar_lea.vmem [#allocation2], %s275
          %s278 = ssub.s32 128, 128
          %279 = vsyncadd %s273, %s278
          %s280 = sadd.s32 %s32, %s31
          %s281 = smul.addr %s280, 128
          %s282 = scalar_lea.hbm %s0, %s281
          %s284 = sshll.u32 %s276, 4
          %s285 = int_to_ptr.vmem [resolvable:$true] %s284
          %287 = dma.hbm_to_vmem [thread:$0]  %s282, 128, %s285, %s273
        $region32: #{tpu_custom_call.1} parent=27 // pred_fallthru
          _
      $region28: #{tpu_custom_call.1} parent=5 // pred_fallthru
        _
      %p288 = scmp.le.s32.totalorder 1, %s24
      %p289 = scmp.lt.s32.totalorder %s24, 3
      %p290 = pnand %p288, %p289
      %p291 = pneg %p290
      // Predicated region
      $region33: #{tpu_custom_call.1} parent=5 // pred_check
        _
      $region34: #{tpu_custom_call.1} parent=5 // pred_check_branch
        %293 = sbr.rel (%p290) target = $region36
      $region35: #{tpu_custom_call.1} parent=5 // pred_region
        %s294 = ssub.s32 %s24, 1
        %s295 = sand.u32 %s51, 1
        %s296 = scalar_lea.sflag [#allocation3], %s295
        %s297 = sand.u32 %s51, 1
        %s298 = smul.addr %s297, 8
        %s299 = scalar_lea.vmem [#allocation2], %s298
        // Predicated region
        $region37: #{tpu_custom_call.1} parent=35 // pred_check
          %p300 = pneg %p64
        $region38: #{tpu_custom_call.1} parent=35 // pred_check_branch
          %302 = sbr.rel (%p300) target = $region40
        $region39: #{tpu_custom_call.1} parent=35 // pred_region
          %303 = dma.done %s296, 128
        $region40: #{tpu_custom_call.1} parent=35 // pred_fallthru
          _
        // Predicated region
        $region41: #{tpu_custom_call.1} parent=35 // pred_check
          %p304 = pneg %p85
        $region42: #{tpu_custom_call.1} parent=35 // pred_check_branch
          %306 = sbr.rel (%p304) target = $region44
        $region43: #{tpu_custom_call.1} parent=35 // pred_region
          %307 = dma.done [#allocation6], 2048
        $region44: #{tpu_custom_call.1} parent=35 // pred_fallthru
          _
        // Predicated region
        $region45: #{tpu_custom_call.1} parent=35 // pred_check
          %p308 = pneg %p106
        $region46: #{tpu_custom_call.1} parent=35 // pred_check_branch
          %310 = sbr.rel (%p308) target = $region48
        $region47: #{tpu_custom_call.1} parent=35 // pred_region
          %311 = dma.done [#allocation6], 2048
        $region48: #{tpu_custom_call.1} parent=35 // pred_fallthru
          _
        // Predicated region
        $region49: #{tpu_custom_call.1} parent=35 // pred_check
          %p312 = pneg %p127
        $region50: #{tpu_custom_call.1} parent=35 // pred_check_branch
          %314 = sbr.rel (%p312) target = $region52
        $region51: #{tpu_custom_call.1} parent=35 // pred_region
          %315 = dma.done [#allocation9], 2048
        $region52: #{tpu_custom_call.1} parent=35 // pred_fallthru
          _
        %s316 = sand.u32 %s51, 1
        %s317 = scalar_lea.sflag [#allocation3], %s316
        %s318 = sand.u32 %s51, 1
        %s319 = smul.addr %s318, 8
        %s320 = scalar_lea.vmem [#allocation2], %s319
        %p321 = pneg %p64
        %p322 = pneg %p61
        %p323 = pneg %p85
        %p324 = pneg %p82
        %p325 = pneg %p106
        %p326 = pneg %p103
        %p327 = pneg %p127
        %p328 = pneg %p124
        %p329 = pneg %p155
        %p330 = pneg %p152
        %s331 = sand.u32 %s142, 1
        %s332 = scalar_lea.sflag [#allocation4], %s331
        %s333 = sand.u32 %s142, 1
        %s334 = smul.addr %s333, 8
        %s335 = scalar_lea.vmem [#allocation10], %s334
        %p336 = pneg %p183
        %p337 = pneg %p180
        %s338 = sand.u32 %s29, 1
        %s339 = scalar_lea.sflag [#allocation12], %s338
        %s340 = sand.u32 %s170, 1
        %s341 = smul.addr %s340, 8
        %s342 = scalar_lea.vmem [#allocation11], %s341
        %p343 = pneg %p211
        %p344 = pneg %p208
        %s345 = sand.u32 %s29, 1
        %s346 = scalar_lea.sflag [#allocation12], %s345
        %s347 = sand.u32 %s198, 1
        %s348 = smul.addr %s347, 8
        %s349 = scalar_lea.vmem [#allocation13], %s348
        %v350 = vld [vmem:[%s299] sm:$0xff]
        %v351 = vld [vmem:[#allocation5] sm:$0xff]
        %v352 = vld [vmem:[#allocation5 + $0x8] sm:$0xff]
        %v353 = vld [vmem:[#allocation5 + $0x10] sm:$0xff]
        %v354 = vld [vmem:[#allocation5 + $0x18] sm:$0xff]
        %v355 = vld [vmem:[#allocation5 + $0x20] sm:$0xff]
        %v356 = vld [vmem:[#allocation5 + $0x28] sm:$0xff]
        %v357 = vld [vmem:[#allocation5 + $0x30] sm:$0xff]
        %v358 = vld [vmem:[#allocation5 + $0x38] sm:$0xff]
        %v359 = vld [vmem:[#allocation5 + $0x40] sm:$0xff]
        %v360 = vld [vmem:[#allocation5 + $0x48] sm:$0xff]
        %v361 = vld [vmem:[#allocation5 + $0x50] sm:$0xff]
        %v362 = vld [vmem:[#allocation5 + $0x58] sm:$0xff]
        %v363 = vld [vmem:[#allocation5 + $0x60] sm:$0xff]
        %v364 = vld [vmem:[#allocation5 + $0x68] sm:$0xff]
        %v365 = vld [vmem:[#allocation5 + $0x70] sm:$0xff]
        %v366 = vld [vmem:[#allocation5 + $0x78] sm:$0xff]
        %v367 = vld [vmem:[#allocation7] sm:$0xff]
        %v368 = vld [vmem:[#allocation7 + $0x8] sm:$0xff]
        %v369 = vld [vmem:[#allocation7 + $0x10] sm:$0xff]
        %v370 = vld [vmem:[#allocation7 + $0x18] sm:$0xff]
        %v371 = vld [vmem:[#allocation7 + $0x20] sm:$0xff]
        %v372 = vld [vmem:[#allocation7 + $0x28] sm:$0xff]
        %v373 = vld [vmem:[#allocation7 + $0x30] sm:$0xff]
        %v374 = vld [vmem:[#allocation7 + $0x38] sm:$0xff]
        %v375 = vld [vmem:[#allocation7 + $0x40] sm:$0xff]
        %v376 = vld [vmem:[#allocation7 + $0x48] sm:$0xff]
        %v377 = vld [vmem:[#allocation7 + $0x50] sm:$0xff]
        %v378 = vld [vmem:[#allocation7 + $0x58] sm:$0xff]
        %v379 = vld [vmem:[#allocation7 + $0x60] sm:$0xff]
        %v380 = vld [vmem:[#allocation7 + $0x68] sm:$0xff]
        %v381 = vld [vmem:[#allocation7 + $0x70] sm:$0xff]
        %v382 = vld [vmem:[#allocation7 + $0x78] sm:$0xff]
        %v383 = vld [vmem:[#allocation8] sm:$0xff]
        %v384 = vld [vmem:[#allocation8 + $0x8] sm:$0xff]
        %v385 = vld [vmem:[#allocation8 + $0x10] sm:$0xff]
        %v386 = vld [vmem:[#allocation8 + $0x18] sm:$0xff]
        %v387 = vld [vmem:[#allocation8 + $0x20] sm:$0xff]
        %v388 = vld [vmem:[#allocation8 + $0x28] sm:$0xff]
        %v389 = vld [vmem:[#allocation8 + $0x30] sm:$0xff]
        %v390 = vld [vmem:[#allocation8 + $0x38] sm:$0xff]
        %v391 = vld [vmem:[#allocation8 + $0x40] sm:$0xff]
        %v392 = vld [vmem:[#allocation8 + $0x48] sm:$0xff]
        %v393 = vld [vmem:[#allocation8 + $0x50] sm:$0xff]
        %v394 = vld [vmem:[#allocation8 + $0x58] sm:$0xff]
        %v395 = vld [vmem:[#allocation8 + $0x60] sm:$0xff]
        %v396 = vld [vmem:[#allocation8 + $0x68] sm:$0xff]
        %v397 = vld [vmem:[#allocation8 + $0x70] sm:$0xff]
        %v398 = vld [vmem:[#allocation8 + $0x78] sm:$0xff]
        %399 = vmatprep.subr.mxu0 0.0
        %400 = vmatpush1.msra.mxu0 %v351
        %401 = vmatprep.subr.mxu0 0.0
        %402 = vmatpush1.msra.mxu0 %v352
        %403 = vmatprep.subr.mxu0 0.0
        %404 = vmatpush1.msra.mxu0 %v353
        %405 = vmatprep.subr.mxu0 0.0
        %406 = vmatpush1.msra.mxu0 %v354
        %407 = vmatprep.subr.mxu0 0.0
        %408 = vmatpush1.msra.mxu0 %v355
        %409 = vmatprep.subr.mxu0 0.0
        %410 = vmatpush1.msra.mxu0 %v356
        %411 = vmatprep.subr.mxu0 0.0
        %412 = vmatpush1.msra.mxu0 %v357
        %413 = vmatprep.subr.mxu0 0.0
        %414 = vmatpush1.msra.mxu0 %v358
        %415 = vmatprep.subr.mxu0 0.0
        %416 = vmatpush1.msra.mxu0 %v359
        %417 = vmatprep.subr.mxu0 0.0
        %418 = vmatpush1.msra.mxu0 %v360
        %419 = vmatprep.subr.mxu0 0.0
        %420 = vmatpush1.msra.mxu0 %v361
        %421 = vmatprep.subr.mxu0 0.0
        %422 = vmatpush1.msra.mxu0 %v362
        %423 = vmatprep.subr.mxu0 0.0
        %424 = vmatpush1.msra.mxu0 %v363
        %425 = vmatprep.subr.mxu0 0.0
        %426 = vmatpush1.msra.mxu0 %v364
        %427 = vmatprep.subr.mxu0 0.0
        %428 = vmatpush1.msra.mxu0 %v365
        %429 = vmatprep.subr.mxu0 0.0
        %430 = vmatpush1.msra.mxu0 %v366
        %431 = vmatprep.subr.mxu0 0.0
        %432 = vmatpush1.msra.mxu0 0.0
        %433 = vmatprep.subr.mxu0 0.0
        %434 = vmatpush1.msra.mxu0 0.0
        %435 = vmatprep.subr.mxu0 0.0
        %436 = vmatpush1.msra.mxu0 0.0
        %437 = vmatprep.subr.mxu0 0.0
        %438 = vmatpush1.msra.mxu0 0.0
        %439 = vmatprep.subr.mxu0 0.0
        %440 = vmatpush1.msra.mxu0 0.0
        %441 = vmatprep.subr.mxu0 0.0
        %442 = vmatpush1.msra.mxu0 0.0
        %443 = vmatprep.subr.mxu0 0.0
        %444 = vmatpush1.msra.mxu0 0.0
        %445 = vmatprep.subr.mxu0 0.0
        %446 = vmatpush1.msra.mxu0 0.0
        %447 = vmatprep.subr.mxu0 0.0
        %448 = vmatpush1.msra.mxu0 0.0
        %449 = vmatprep.subr.mxu0 0.0
        %450 = vmatpush1.msra.mxu0 0.0
        %451 = vmatprep.subr.mxu0 0.0
        %452 = vmatpush1.msra.mxu0 0.0
        %453 = vmatprep.subr.mxu0 0.0
        %454 = vmatpush1.msra.mxu0 0.0
        %455 = vmatprep.subr.mxu0 0.0
        %456 = vmatpush1.msra.mxu0 0.0
        %457 = vmatprep.subr.mxu0 0.0
        %458 = vmatpush1.msra.mxu0 0.0
        %459 = vmatprep.subr.mxu0 0.0
        %460 = vmatpush1.msra.mxu0 0.0
        %461 = vmatprep.subr.mxu0 0.0
        %462 = vmatpush1.msra.mxu0 0.0
        %463 = vmatprep.mubr.f32.mxu0 0.0
        %464 = vmatmul.mubr.f32.gmra.mrb[0].mxu0 %v350
        %v465 = vpop.f32.mrb[0].mxu0
        %v466 = vadd.f32 0.0, %v465
        %v467 = vpop.f32.mrb[0].mxu0
        %468 = vdwg.mxu0
        %v469 = vmul.f32 %v466, 0.17677669
        %470 = vmatprep.subr.mxu0 0.0
        %471 = vmatpush1.msra.mxu0 %v367
        %472 = vmatprep.subr.mxu0 0.0
        %473 = vmatpush1.msra.mxu0 %v368
        %474 = vmatprep.subr.mxu0 0.0
        %475 = vmatpush1.msra.mxu0 %v369
        %476 = vmatprep.subr.mxu0 0.0
        %477 = vmatpush1.msra.mxu0 %v370
        %478 = vmatprep.subr.mxu0 0.0
        %479 = vmatpush1.msra.mxu0 %v371
        %480 = vmatprep.subr.mxu0 0.0
        %481 = vmatpush1.msra.mxu0 %v372
        %482 = vmatprep.subr.mxu0 0.0
        %483 = vmatpush1.msra.mxu0 %v373
        %484 = vmatprep.subr.mxu0 0.0
        %485 = vmatpush1.msra.mxu0 %v374
        %486 = vmatprep.subr.mxu0 0.0
        %487 = vmatpush1.msra.mxu0 %v375
        %488 = vmatprep.subr.mxu0 0.0
        %489 = vmatpush1.msra.mxu0 %v376
        %490 = vmatprep.subr.mxu0 0.0
        %491 = vmatpush1.msra.mxu0 %v377
        %492 = vmatprep.subr.mxu0 0.0
        %493 = vmatpush1.msra.mxu0 %v378
        %494 = vmatprep.subr.mxu0 0.0
        %495 = vmatpush1.msra.mxu0 %v379
        %496 = vmatprep.subr.mxu0 0.0
        %497 = vmatpush1.msra.mxu0 %v380
        %498 = vmatprep.subr.mxu0 0.0
        %499 = vmatpush1.msra.mxu0 %v381
        %500 = vmatprep.subr.mxu0 0.0
        %501 = vmatpush1.msra.mxu0 %v382
        %502 = vmatprep.subr.mxu0 0.0
        %503 = vmatpush1.msra.mxu0 0.0
        %504 = vmatprep.subr.mxu0 0.0
        %505 = vmatpush1.msra.mxu0 0.0
        %506 = vmatprep.subr.mxu0 0.0
        %507 = vmatpush1.msra.mxu0 0.0
        %508 = vmatprep.subr.mxu0 0.0
        %509 = vmatpush1.msra.mxu0 0.0
        %510 = vmatprep.subr.mxu0 0.0
        %511 = vmatpush1.msra.mxu0 0.0
        %512 = vmatprep.subr.mxu0 0.0
        %513 = vmatpush1.msra.mxu0 0.0
        %514 = vmatprep.subr.mxu0 0.0
        %515 = vmatpush1.msra.mxu0 0.0
        %516 = vmatprep.subr.mxu0 0.0
        %517 = vmatpush1.msra.mxu0 0.0
        %518 = vmatprep.subr.mxu0 0.0
        %519 = vmatpush1.msra.mxu0 0.0
        %520 = vmatprep.subr.mxu0 0.0
        %521 = vmatpush1.msra.mxu0 0.0
        %522 = vmatprep.subr.mxu0 0.0
        %523 = vmatpush1.msra.mxu0 0.0
        %524 = vmatprep.subr.mxu0 0.0
        %525 = vmatpush1.msra.mxu0 0.0
        %526 = vmatprep.subr.mxu0 0.0
        %527 = vmatpush1.msra.mxu0 0.0
        %528 = vmatprep.subr.mxu0 0.0
        %529 = vmatpush1.msra.mxu0 0.0
        %530 = vmatprep.subr.mxu0 0.0
        %531 = vmatpush1.msra.mxu0 0.0
        %532 = vmatprep.subr.mxu0 0.0
        %533 = vmatpush1.msra.mxu0 0.0
        %534 = vmatprep.mubr.f32.mxu0 0.0
        %535 = vmatmul.mubr.f32.gmra.mrb[0].mxu0 %v350
        %v536 = vpop.f32.mrb[0].mxu0
        %v537 = vadd.f32 0.0, %v536
        %v538 = vpop.f32.mrb[0].mxu0
        %539 = vdwg.mxu0
        %540 = vmatprep.subr.mxu0 0.0
        %541 = vmatpush1.msra.mxu0 %v383
        %542 = vmatprep.subr.mxu0 0.0
        %543 = vmatpush1.msra.mxu0 %v384
        %544 = vmatprep.subr.mxu0 0.0
        %545 = vmatpush1.msra.mxu0 %v385
        %546 = vmatprep.subr.mxu0 0.0
        %547 = vmatpush1.msra.mxu0 %v386
        %548 = vmatprep.subr.mxu0 0.0
        %549 = vmatpush1.msra.mxu0 %v387
        %550 = vmatprep.subr.mxu0 0.0
        %551 = vmatpush1.msra.mxu0 %v388
        %552 = vmatprep.subr.mxu0 0.0
        %553 = vmatpush1.msra.mxu0 %v389
        %554 = vmatprep.subr.mxu0 0.0
        %555 = vmatpush1.msra.mxu0 %v390
        %556 = vmatprep.subr.mxu0 0.0
        %557 = vmatpush1.msra.mxu0 %v391
        %558 = vmatprep.subr.mxu0 0.0
        %559 = vmatpush1.msra.mxu0 %v392
        %560 = vmatprep.subr.mxu0 0.0
        %561 = vmatpush1.msra.mxu0 %v393
        %562 = vmatprep.subr.mxu0 0.0
        %563 = vmatpush1.msra.mxu0 %v394
        %564 = vmatprep.subr.mxu0 0.0
        %565 = vmatpush1.msra.mxu0 %v395
        %566 = vmatprep.subr.mxu0 0.0
        %567 = vmatpush1.msra.mxu0 %v396
        %568 = vmatprep.subr.mxu0 0.0
        %569 = vmatpush1.msra.mxu0 %v397
        %570 = vmatprep.subr.mxu0 0.0
        %571 = vmatpush1.msra.mxu0 %v398
        %572 = vmatprep.subr.mxu0 0.0
        %573 = vmatpush1.msra.mxu0 0.0
        %574 = vmatprep.subr.mxu0 0.0
        %575 = vmatpush1.msra.mxu0 0.0
        %576 = vmatprep.subr.mxu0 0.0
        %577 = vmatpush1.msra.mxu0 0.0
        %578 = vmatprep.subr.mxu0 0.0
        %579 = vmatpush1.msra.mxu0 0.0
        %580 = vmatprep.subr.mxu0 0.0
        %581 = vmatpush1.msra.mxu0 0.0
        %582 = vmatprep.subr.mxu0 0.0
        %583 = vmatpush1.msra.mxu0 0.0
        %584 = vmatprep.subr.mxu0 0.0
        %585 = vmatpush1.msra.mxu0 0.0
        %586 = vmatprep.subr.mxu0 0.0
        %587 = vmatpush1.msra.mxu0 0.0
        %588 = vmatprep.subr.mxu0 0.0
        %589 = vmatpush1.msra.mxu0 0.0
        %590 = vmatprep.subr.mxu0 0.0
        %591 = vmatpush1.msra.mxu0 0.0
        %592 = vmatprep.subr.mxu0 0.0
        %593 = vmatpush1.msra.mxu0 0.0
        %594 = vmatprep.subr.mxu0 0.0
        %595 = vmatpush1.msra.mxu0 0.0
        %596 = vmatprep.subr.mxu0 0.0
        %597 = vmatpush1.msra.mxu0 0.0
        %598 = vmatprep.subr.mxu0 0.0
        %599 = vmatpush1.msra.mxu0 0.0
        %600 = vmatprep.subr.mxu0 0.0
        %601 = vmatpush1.msra.mxu0 0.0
        %602 = vmatprep.subr.mxu0 0.0
        %603 = vmatpush1.msra.mxu0 0.0
        %604 = vmatprep.mubr.f32.mxu0 0.0
        %605 = vmatmul.mubr.f32.gmra.mrb[0].mxu0 %v350
        %v606 = vpop.f32.mrb[0].mxu0
        %v607 = vadd.f32 0.0, %v606
        %v608 = vpop.f32.mrb[0].mxu0
        %609 = vdwg.mxu0
        %610 = vst [vmem:[%s335] sm:$0xff] %v469
        %611 = vst [vmem:[%s342] sm:$0xff] %v537
        %612 = vst [vmem:[%s349] sm:$0xff] %v607
        %s613 = sand.u32 %s142, 1
        %s614 = scalar_lea.sflag [#allocation4], %s613
        %s615 = sand.u32 %s142, 1
        %s616 = smul.addr %s615, 8
        %s617 = scalar_lea.vmem [#allocation10], %s616
        %s618 = sand.u32 %s29, 1
        %s619 = scalar_lea.sflag [#allocation12], %s618
        %s620 = sand.u32 %s170, 1
        %s621 = smul.addr %s620, 8
        %s622 = scalar_lea.vmem [#allocation11], %s621
        %s623 = sand.u32 %s29, 1
        %s624 = scalar_lea.sflag [#allocation12], %s623
        %s625 = sand.u32 %s198, 1
        %s626 = smul.addr %s625, 8
        %s627 = scalar_lea.vmem [#allocation13], %s626
        // Predicated region
        $region53: #{tpu_custom_call.1} parent=35 // pred_check
          %p628 = pneg %p152
        $region54: #{tpu_custom_call.1} parent=35 // pred_check_branch
          %630 = sbr.rel (%p628) target = $region56
        $region55: #{tpu_custom_call.1} parent=35 // pred_region
          %s632 = ssub.s32 128, 128
          %633 = vsyncadd %s614, %s632
          %s634 = sadd.s32 %s34, %s33
          %s635 = smul.addr %s634, 128
          %s636 = scalar_lea.hbm %s4, %s635
          %s638 = sshll.u32 %s617, 4
          %s639 = int_to_ptr.vmem [resolvable:$true] %s638
          %641 = dma.vmem_to_hbm [thread:$0]  %s639, 128, %s636, %s614
        $region56: #{tpu_custom_call.1} parent=35 // pred_fallthru
          _
        // Predicated region
        $region57: #{tpu_custom_call.1} parent=35 // pred_check
          %p642 = pneg %p180
        $region58: #{tpu_custom_call.1} parent=35 // pred_check_branch
          %644 = sbr.rel (%p642) target = $region60
        $region59: #{tpu_custom_call.1} parent=35 // pred_region
          %s646 = ssub.s32 128, 128
          %647 = vsyncadd %s619, %s646
          %s648 = sadd.s32 %s34, %s33
          %s649 = smul.addr %s648, 128
          %s650 = scalar_lea.hbm %s5, %s649
          %s652 = sshll.u32 %s622, 4
          %s653 = int_to_ptr.vmem [resolvable:$true] %s652
          %655 = dma.vmem_to_hbm [thread:$0]  %s653, 128, %s650, %s619
        $region60: #{tpu_custom_call.1} parent=35 // pred_fallthru
          _
        // Predicated region
        $region61: #{tpu_custom_call.1} parent=35 // pred_check
          %p656 = pneg %p208
        $region62: #{tpu_custom_call.1} parent=35 // pred_check_branch
          %658 = sbr.rel (%p656) target = $region64
        $region63: #{tpu_custom_call.1} parent=35 // pred_region
          %s660 = ssub.s32 128, 128
          %661 = vsyncadd %s624, %s660
          %s662 = sadd.s32 %s34, %s33
          %s663 = smul.addr %s662, 128
          %s664 = scalar_lea.hbm %s6, %s663
          %s666 = sshll.u32 %s627, 4
          %s667 = int_to_ptr.vmem [resolvable:$true] %s666
          %669 = dma.vmem_to_hbm [thread:$0]  %s667, 128, %s664, %s624
        $region64: #{tpu_custom_call.1} parent=35 // pred_fallthru
          _
      $region36: #{tpu_custom_call.1} parent=5 // pred_fallthru
        _
      %p670 = scmp.le.s32.totalorder 2, %s24
      // Predicated region
      $region65: #{tpu_custom_call.1} parent=5 // pred_check
        %p671 = pneg %p670
      $region66: #{tpu_custom_call.1} parent=5 // pred_check_branch
        %673 = sbr.rel (%p671) target = $region68
      $region67: #{tpu_custom_call.1} parent=5 // pred_region
        %s674 = ssub.s32 %s24, 2
        // Predicated region
        $region69: #{tpu_custom_call.1} parent=67 // pred_check
          %p675 = pneg %p158
        $region70: #{tpu_custom_call.1} parent=67 // pred_check_branch
          %677 = sbr.rel (%p675) target = $region72
        $region71: #{tpu_custom_call.1} parent=67 // pred_region
          %s678 = sand.u32 %s143, 1
          %s679 = scalar_lea.sflag [#allocation4], %s678
          %s680 = sand.u32 %s143, 1
          %s681 = smul.addr %s680, 8
          %s682 = scalar_lea.vmem [#allocation10], %s681
          %683 = dma.done %s679, 128
        $region72: #{tpu_custom_call.1} parent=67 // pred_fallthru
          _
        // Predicated region
        $region73: #{tpu_custom_call.1} parent=67 // pred_check
          %p684 = pneg %p186
        $region74: #{tpu_custom_call.1} parent=67 // pred_check_branch
          %686 = sbr.rel (%p684) target = $region76
        $region75: #{tpu_custom_call.1} parent=67 // pred_region
          %s687 = sand.u32 %s30, 1
          %s688 = scalar_lea.sflag [#allocation12], %s687
          %s689 = sand.u32 %s171, 1
          %s690 = smul.addr %s689, 8
          %s691 = scalar_lea.vmem [#allocation11], %s690
          %692 = dma.done %s688, 128
        $region76: #{tpu_custom_call.1} parent=67 // pred_fallthru
          _
        // Predicated region
        $region77: #{tpu_custom_call.1} parent=67 // pred_check
          %p693 = pneg %p214
        $region78: #{tpu_custom_call.1} parent=67 // pred_check_branch
          %695 = sbr.rel (%p693) target = $region80
        $region79: #{tpu_custom_call.1} parent=67 // pred_region
          %s696 = sand.u32 %s30, 1
          %s697 = scalar_lea.sflag [#allocation12], %s696
          %s698 = sand.u32 %s199, 1
          %s699 = smul.addr %s698, 8
          %s700 = scalar_lea.vmem [#allocation13], %s699
          %701 = dma.done %s697, 128
        $region80: #{tpu_custom_call.1} parent=67 // pred_fallthru
          _
      $region68: #{tpu_custom_call.1} parent=5 // pred_fallthru
        _
    $region6: #{tpu_custom_call.1} parent=1 // loop_footer
      %s28 = sadd.s32 1, %s24
    $region7: #{tpu_custom_call.1} parent=1 // loop_footer_branch
      %23 = sbr.rel target = $region3
    $region8: #{tpu_custom_call.1} parent=1 // loop_exit
      _
    %702 = vsyncpa [#allocation3], 1
    %s703 = scalar_lea.sflag [#allocation3], 1
    %704 = vsyncpa %s703, 1
    %705 = vsyncpa [#allocation6], 1
    %706 = vsyncpa [#allocation9], 1
    %707 = vsyncpa [#allocation4], 1
    %s708 = scalar_lea.sflag [#allocation4], 1
    %709 = vsyncpa %s708, 1
    %710 = vsyncpa [#allocation12], 1
    %s711 = scalar_lea.sflag [#allocation12], 1
    %712 = vsyncpa %s711, 1

</llo_original>
